<compile_context>
chip_gen: v7x
topology: tpu7x:2x2x1
jax: 0.10.0
libtpu: 0.0.40
codegen_flags: <defaults>
</compile_context>

<pallas_src>
import numpy as np
import jax
import jax.numpy as jnp
from jax.experimental import pallas as pl
from jax.experimental.pallas import tpu as pltpu


# ------------------------------------------------------------------
# Graph construction (static host-side glue, mirrors the PyTorch statics)
# ------------------------------------------------------------------
def _connect_index_to_sized_square(i, j, size, square_size, edges):
    square_size = min(square_size, size)
    current_index = i * size + j
    i_start = max(i - square_size // 2, 0)
    i_end = min(i + square_size // 2, size - 1)
    j_start = max(j - square_size // 2, 0)
    j_end = min(j + square_size // 2, size - 1)
    for ii in range(i_start, i_end + 1):
        for jj in range(j_start, j_end + 1):
            pair = (current_index, ii * size + jj)
            if pair not in edges:
                edges.add(pair)


def create_grid_edges(size):
    mid_index = size // 2
    edges = set()
    for i in range(size):
        for j in range(size):
            index = i * size + j
            if i > 0:
                edges.add((index, index - size))
            if i < size - 1:
                edges.add((index, index + size))
            if j > 0:
                edges.add((index, index - 1))
            if j < size - 1:
                edges.add((index, index + 1))
            if i > 0:
                if j > 0:
                    edges.add((index, index - size - 1))
                if j < size - 1:
                    edges.add((index, index - size + 1))
            if i < size - 1:
                if j > 0:
                    edges.add((index, index + size - 1))
                if j < size - 1:
                    edges.add((index, index + size + 1))
            max_kernel = 8
            min_kernel = 3
            if (min_kernel <= abs(i - mid_index) <= max_kernel
                    and min_kernel <= abs(j - mid_index) <= max_kernel):
                square_size = (max_kernel - abs(i - mid_index)
                               + max_kernel - abs(j - mid_index))
                _connect_index_to_sized_square(i, j, size, square_size, edges)
    return list(edges)


def gcn_graph_operators(size):
    """Static per-`size` host precompute (cache this). Returns f32 jnp arrays
      anorm      (n, n): dense PyG gcn_norm aggregation matrix
                         (add_remaining_self_loops + symmetric normalization),
      a2T        (n, n): (anorm @ anorm)^T  -- single-propagation operator,
      rowsum_row (1, n): per-node row sums of anorm (for the fused bias)."""
    n = size * size
    edges = create_grid_edges(size)
    m = np.zeros((n, n), dtype=np.float64)   # m[src, dst] = edge weight
    for src, dst in edges:
        if src != dst:
            m[src, dst] = 1.0
    np.fill_diagonal(m, 1.0)                 # self-loops (existing or added)
    a = m.T                                  # a[dst, src]: aggregation matrix
    deg = a.sum(axis=1)
    dinv = 1.0 / np.sqrt(np.maximum(deg, 1e-12))
    anorm32 = ((dinv[:, None] * a) * dinv[None, :]).astype(np.float32)
    # A2 and rowsum computed in f64 over the *same* f32 anorm the reference
    # uses, so the only kernel-vs-reference delta is f32 reassociation.
    anorm64 = anorm32.astype(np.float64)
    a2T = (anorm64 @ anorm64).T.astype(np.float32)
    rowsum_row = anorm64.sum(axis=1).astype(np.float32).reshape(1, n)
    return (jnp.asarray(anorm32), jnp.asarray(a2T), jnp.asarray(rowsum_row))


# ------------------------------------------------------------------
# Pallas kernel: fused two-layer linear GCN, transposed (lane-dense) layout
# ------------------------------------------------------------------
def _graphnet_kernel(a2t_ref, xT_ref, wcT_ref, bw_ref, rs_ref, b2_ref, o_ref):
    # Z^T = blockdiag(Wc^T) @ X^T                      (B*O, n)   tiny MXU matmul
    zT = jnp.dot(wcT_ref[...], xT_ref[...], preferred_element_type=jnp.float32)
    # Y^T = Z^T @ (Anorm @ Anorm)^T                    (B*O, n)   one propagation
    yT = jnp.dot(zT, a2t_ref[...], preferred_element_type=jnp.float32)
    # bias^T = (b1@W2)^T * rowsum(Anorm) + b2^T        VPU outer-product broadcast
    o_ref[...] = yT + bw_ref[...] * rs_ref[...] + b2_ref[...]


def graphnet_forward(x, a2t, rowsum_row, w1, b1, w2, b2, *, size, in_channels,
                     out_channels):
    """x: (B, in_channels, size, size) or (in_channels, size, size).
    Returns (B, out_channels, size, size) (unbatched in -> unbatched out)."""
    squeeze = (x.ndim == 3)
    if squeeze:
        x = x[None]
    B = x.shape[0]
    n = size * size
    C = in_channels
    O = out_channels
    hi = jax.lax.Precision.HIGHEST

    x = x.astype(jnp.float32)
    w1 = w1.astype(jnp.float32)
    w2 = w2.astype(jnp.float32)
    b1 = b1.astype(jnp.float32)
    b2 = b2.astype(jnp.float32)

    # ---- algebraic fusion of the two linear GCN layers (host, tiny) ----
    wc = jnp.dot(w1, w2, precision=hi)                 # (C, O)  fused weight
    bw = jnp.dot(b1, w2, precision=hi)                 # (1, O)  b1 through W2

    # ---- batch folded into the rows of the transposed formulation ----
    wcT_bd = jnp.kron(jnp.eye(B, dtype=jnp.float32), wc.T)        # (B*O, B*C)
    xT = x.reshape(B, n, C).transpose(0, 2, 1).reshape(B * C, n)  # (B*C, n)
    bw_col = jnp.tile(bw.T, (B, 1))                               # (B*O, 1)
    b2_col = jnp.tile(b2.reshape(O, 1), (B, 1))                   # (B*O, 1)

    rows = B * O
    flops = 2 * rows * (B * C) * n + 2 * rows * n * n
    bytes_accessed = 4 * (n * n + B * C * n + rows * B * C + 2 * rows + n
                          + rows * n)

    # TODO(synk): for size >= ~45 (n >= ~2048) tile the n (contraction) axis
    # with a grid, skip all-zero blocks of A2^T via a scalar-prefetched block
    # mask (grid-graph band sparsity ~10/size), mark independent axes
    # "parallel" for v7x's 2 TensorCores, and raise vmem_limit_bytes for
    # v5e's 16 MiB scoped default. At size=16 all operands (<300 KB) stay
    # resident in a single ungridded invocation.
    vmem = pl.BlockSpec(memory_space=pltpu.MemorySpace.VMEM)
    yT = pl.pallas_call(
        _graphnet_kernel,
        out_shape=jax.ShapeDtypeStruct((rows, n), jnp.float32),
        in_specs=[vmem] * 6,
        out_specs=vmem,
        cost_estimate=pl.CostEstimate(flops=flops, transcendentals=0,
                                      bytes_accessed=bytes_accessed),
    )(a2t, xT, wcT_bd, bw_col, rowsum_row, b2_col)

    # Y_b = Y_b^T.T (n, O), then the PyTorch raw reshape (n, O)->(O, size, size).
    out = yT.reshape(B, O, n).transpose(0, 2, 1).reshape(B, O, size, size)
    return out[0] if squeeze else out


# ------------------------------------------------------------------
# Pure-JAX reference (unfused two-layer GCN, single image)
# ------------------------------------------------------------------
def graphnet_reference(x_single, anorm, w1, b1, w2, b2, *, size, in_channels,
                       out_channels):
    hi = jax.lax.Precision.HIGHEST
    x2d = x_single.reshape(size * size, in_channels).astype(jnp.float32)
    h = jnp.dot(anorm, jnp.dot(x2d, w1, precision=hi), precision=hi) + b1
    y = jnp.dot(anorm, jnp.dot(h, w2, precision=hi), precision=hi) + b2
    return y.reshape(out_channels, size, size)


# ------------------------------------------------------------------
# Deterministic parameter init (glorot-uniform weights, small-uniform bias)
# ------------------------------------------------------------------
def glorot_uniform(key, fan_in, fan_out):
    lim = np.sqrt(6.0 / (fan_in + fan_out))
    return jax.random.uniform(key, (fan_in, fan_out), jnp.float32, -lim, lim)


if __name__ == "__main__":
    size = 16
    in_channels = 4
    out_channels = 4
    hidden = 2 * out_channels
    batch = 2

    key = jax.random.PRNGKey(0)
    kx, kw1, kb1, kw2, kb2 = jax.random.split(key, 5)

    # Batched input in PyTorch CHW layout: (batch, in_channels, size, size)
    x = jax.random.normal(kx, (batch, in_channels, size, size), jnp.float32)

    w1 = glorot_uniform(kw1, in_channels, hidden)                 # (in, 2*out)
    b1 = jax.random.uniform(kb1, (1, hidden), jnp.float32, -0.1, 0.1)
    w2 = glorot_uniform(kw2, hidden, out_channels)                # (2*out, out)
    b2 = jax.random.uniform(kb2, (1, out_channels), jnp.float32, -0.1, 0.1)

    anorm, a2t, rowsum_row = gcn_graph_operators(size)            # static graph

    out = graphnet_forward(x, a2t, rowsum_row, w1, b1, w2, b2, size=size,
                           in_channels=in_channels, out_channels=out_channels)
    out = jax.block_until_ready(out)
    assert out.shape == (batch, out_channels, size, size)

    for b in range(batch):
        ref_b = graphnet_reference(x[b], anorm, w1, b1, w2, b2, size=size,
                                   in_channels=in_channels,
                                   out_channels=out_channels)
        np.testing.assert_allclose(np.asarray(out[b]), np.asarray(ref_b),
                                   rtol=1e-4, atol=5e-5)

    print("KERNEL_OK")
</pallas_src>

<mosaic_0001>
module attributes {stable_mosaic.version = 11 : i64} {
  func.func @_graphnet_kernel(%arg0: memref<256x256xf32, #tpu.memory_space<vmem>>, %arg1: memref<8x256xf32, #tpu.memory_space<vmem>>, %arg2: memref<8x8xf32, #tpu.memory_space<vmem>>, %arg3: memref<8x1xf32, #tpu.memory_space<vmem>>, %arg4: memref<1x256xf32, #tpu.memory_space<vmem>>, %arg5: memref<8x1xf32, #tpu.memory_space<vmem>>, %arg6: memref<8x256xf32, #tpu.memory_space<vmem>>) attributes {dimension_semantics = [], scalar_prefetch = 0 : i64, scratch_operands = 0 : i64, tpu.core_type = #tpu.core_type<tc>} {
    %c0 = arith.constant 0 : index
    %c0_0 = arith.constant 0 : index
    %0 = vector.load %arg2[%c0, %c0_0] : memref<8x8xf32, #tpu.memory_space<vmem>>, vector<8x8xf32>
    %c0_1 = arith.constant 0 : index
    %c0_2 = arith.constant 0 : index
    %1 = vector.load %arg1[%c0_1, %c0_2] : memref<8x256xf32, #tpu.memory_space<vmem>>, vector<8x256xf32>
    %cst = arith.constant dense<0.000000e+00> : vector<8x256xf32>
    %2 = tpu.matmul %0, %1, %cst {dimension_numbers = #tpu.dot_dimension_numbers<[1], [0], [0], [1], [0, 0, 1, 1], [], []>} : vector<8x8xf32>, vector<8x256xf32>, vector<8x256xf32> -> vector<8x256xf32>
    %c0_3 = arith.constant 0 : index
    %c0_4 = arith.constant 0 : index
    %3 = vector.load %arg0[%c0_3, %c0_4] : memref<256x256xf32, #tpu.memory_space<vmem>>, vector<256x256xf32>
    %cst_5 = arith.constant dense<0.000000e+00> : vector<8x256xf32>
    %4 = tpu.matmul %2, %3, %cst_5 {dimension_numbers = #tpu.dot_dimension_numbers<[1], [0], [0], [1], [0, 0, 1, 1], [], []>} : vector<8x256xf32>, vector<256x256xf32>, vector<8x256xf32> -> vector<8x256xf32>
    %c0_6 = arith.constant 0 : index
    %c0_7 = arith.constant 0 : index
    %5 = vector.load %arg3[%c0_6, %c0_7] : memref<8x1xf32, #tpu.memory_space<vmem>>, vector<8x1xf32>
    %c0_8 = arith.constant 0 : index
    %c0_9 = arith.constant 0 : index
    %6 = vector.load %arg4[%c0_8, %c0_9] : memref<1x256xf32, #tpu.memory_space<vmem>>, vector<1x256xf32>
    %7 = vector.broadcast %5 : vector<8x1xf32> to vector<8x256xf32>
    %8 = vector.broadcast %6 : vector<1x256xf32> to vector<8x256xf32>
    %9 = arith.mulf %7, %8 : vector<8x256xf32>
    %10 = arith.addf %4, %9 : vector<8x256xf32>
    %c0_10 = arith.constant 0 : index
    %c0_11 = arith.constant 0 : index
    %11 = vector.load %arg5[%c0_10, %c0_11] : memref<8x1xf32, #tpu.memory_space<vmem>>, vector<8x1xf32>
    %12 = vector.broadcast %11 : vector<8x1xf32> to vector<8x256xf32>
    %13 = arith.addf %10, %12 : vector<8x256xf32>
    %c0_12 = arith.constant 0 : index
    %c0_13 = arith.constant 0 : index
    %14 = vector.load %arg6[%c0_12, %c0_13] : memref<8x256xf32, #tpu.memory_space<vmem>>, vector<8x256xf32>
    tpu.vector_store %arg6[%c0_12, %c0_13], %13 {strides = array<i32>} : memref<8x256xf32, #tpu.memory_space<vmem>>, vector<8x256xf32>,
    return
  }
}

</mosaic_0001>

<llo_original>
// kernel: tpu_custom_call.1
$region0: #{tpu_custom_call.1}
  #allocation0 [shape = 'u32[]', space=smem, size = 0x4, offset = 0x4, fixed_abs, tag = 'smem constant byte address 0x4 - core index']
  #allocation1 [shape = 'u32[144,128]{1,0:T(1,128)}', space=vmem, size = 0x12000, scoped, tag = 'internal scratch']
  %s0 = inlined_call_operand.hbm [shape: f32[256,256], index: 0, kind: input, shape index: {}]
  %s1 = inlined_call_operand.vmem [shape: f32[8,256], index: 1, kind: input, shape index: {}]
  %s2 = inlined_call_operand.vmem [shape: f32[8,8], index: 2, kind: input, shape index: {}]
  %s3 = inlined_call_operand.vmem [shape: f32[8,1], index: 3, kind: input, shape index: {}]
  %s4 = inlined_call_operand.vmem [shape: f32[1,256], index: 4, kind: input, shape index: {}]
  %s5 = inlined_call_operand.vmem [shape: f32[8,1], index: 5, kind: input, shape index: {}]
  %s6 = inlined_call_operand.hbm [shape: f32[8,256], index: 6, kind: output, shape index: {}]
  %s7 = sld [smem:[#allocation0]]
  $region38: #{tpu_custom_call.1} parent=0
    _
  %s9 = ssub.s32 1, %s7
  %s10 = scalar_select 0, %s9, %s7
  $region1: #{tpu_custom_call.1} parent=0
    #allocation2 [shape = 'u8[262144]{0}', space=vmem, size = 0x40000, scoped, tag = 'input window, operand 0, single buffered']
    #allocation3 [shape = 's32[1]{0}', space=sflag, size = 0x4, scoped, tag = 'scoped memory for tpu_custom_call.1']
    #allocation4 [shape = 's32[1]{0}', space=sflag, size = 0x4, scoped, tag = 'scoped memory for tpu_custom_call.1']
    #allocation5 [shape = 'u8[8192]{0}', space=vmem, size = 0x2000, scoped, tag = 'output window, operand 0, single buffered']
    %11 = vsyncpa [#allocation3], 0
    %12 = vsyncpa [#allocation4], 0
    // Predicated region
    $region2: #{tpu_custom_call.1} parent=1 // pred_check
      _
    $region3: #{tpu_custom_call.1} parent=1 // pred_check_branch
      %14 = sbr.rel (0) target = $region5
    $region4: #{tpu_custom_call.1} parent=1 // pred_region
      %s16 = ssub.s32 8192, 8192
      %17 = vsyncadd [#allocation3], %s16
      %s18 = sshll.u32 [#allocation2], 4
      %s19 = int_to_ptr.vmem [resolvable:$true] %s18
      %24 = dma.hbm_to_vmem [thread:$0]  %s0, 8192, %s19, [#allocation3], 256, 256, 16
    $region5: #{tpu_custom_call.1} parent=1 // pred_fallthru
      _
    // Predicated region
    $region6: #{tpu_custom_call.1} parent=1 // pred_check
      _
    $region7: #{tpu_custom_call.1} parent=1 // pred_check_branch
      %26 = sbr.rel (0) target = $region9
    $region8: #{tpu_custom_call.1} parent=1 // pred_region
      _
    $region9: #{tpu_custom_call.1} parent=1 // pred_fallthru
      _
    // Predicated region
    $region10: #{tpu_custom_call.1} parent=1 // pred_check
      _
    $region11: #{tpu_custom_call.1} parent=1 // pred_check_branch
      %28 = sbr.rel (0) target = $region13
    $region12: #{tpu_custom_call.1} parent=1 // pred_region
      _
    $region13: #{tpu_custom_call.1} parent=1 // pred_fallthru
      _
    // Predicated region
    $region14: #{tpu_custom_call.1} parent=1 // pred_check
      _
    $region15: #{tpu_custom_call.1} parent=1 // pred_check_branch
      %30 = sbr.rel (0) target = $region17
    $region16: #{tpu_custom_call.1} parent=1 // pred_region
      _
    $region17: #{tpu_custom_call.1} parent=1 // pred_fallthru
      _
    // Predicated region
    $region18: #{tpu_custom_call.1} parent=1 // pred_check
      _
    $region19: #{tpu_custom_call.1} parent=1 // pred_check_branch
      %32 = sbr.rel (0) target = $region21
    $region20: #{tpu_custom_call.1} parent=1 // pred_region
      _
    $region21: #{tpu_custom_call.1} parent=1 // pred_fallthru
      _
    // Predicated region
    $region22: #{tpu_custom_call.1} parent=1 // pred_check
      _
    $region23: #{tpu_custom_call.1} parent=1 // pred_check_branch
      %34 = sbr.rel (0) target = $region25
    $region24: #{tpu_custom_call.1} parent=1 // pred_region
      _
    $region25: #{tpu_custom_call.1} parent=1 // pred_fallthru
      _
    // Predicated region
    $region26: #{tpu_custom_call.1} parent=1 // pred_check
      _
    $region27: #{tpu_custom_call.1} parent=1 // pred_check_branch
      %36 = sbr.rel (0) target = $region29
    $region28: #{tpu_custom_call.1} parent=1 // pred_region
      %37 = dma.done [#allocation3], 8192
    $region29: #{tpu_custom_call.1} parent=1 // pred_fallthru
      _
    %v38 = vld [vmem:[%s2] sm:$0xff]
    %v39 = vld [vmem:[%s1] sm:$0xff]
    %v40 = vld [vmem:[%s1 + $0x8] sm:$0xff]
    %vm41 = vcmask 64512
    %v43 = vsel %vm41, %v38, 0
    %45 = vmatprep.subr.mxu0 %v40
    %46 = vmatpush1.msra.mxu0 %v39
    %47 = vmatprep.subr.mxu0 0.0
    %48 = vmatpush1.msra.mxu0 0.0
    %49 = vmatprep.subr.mxu0 0.0
    %50 = vmatpush1.msra.mxu0 0.0
    %51 = vmatprep.subr.mxu0 0.0
    %52 = vmatpush1.msra.mxu0 0.0
    %53 = vmatprep.subr.mxu0 0.0
    %54 = vmatpush1.msra.mxu0 0.0
    %55 = vmatprep.subr.mxu0 0.0
    %56 = vmatpush1.msra.mxu0 0.0
    %57 = vmatprep.subr.mxu0 0.0
    %58 = vmatpush1.msra.mxu0 0.0
    %59 = vmatprep.subr.mxu0 0.0
    %60 = vmatpush1.msra.mxu0 0.0
    %61 = vmatprep.subr.mxu0 0.0
    %62 = vmatpush1.msra.mxu0 0.0
    %63 = vmatprep.subr.mxu0 0.0
    %64 = vmatpush1.msra.mxu0 0.0
    %65 = vmatprep.subr.mxu0 0.0
    %66 = vmatpush1.msra.mxu0 0.0
    %67 = vmatprep.subr.mxu0 0.0
    %68 = vmatpush1.msra.mxu0 0.0
    %69 = vmatprep.subr.mxu0 0.0
    %70 = vmatpush1.msra.mxu0 0.0
    %71 = vmatprep.subr.mxu0 0.0
    %72 = vmatpush1.msra.mxu0 0.0
    %73 = vmatprep.subr.mxu0 0.0
    %74 = vmatpush1.msra.mxu0 0.0
    %75 = vmatprep.subr.mxu0 0.0
    %76 = vmatpush1.msra.mxu0 0.0
    %77 = vmatprep.subr.mxu0 0.0
    %78 = vmatpush1.msra.mxu0 0.0
    %79 = vmatprep.subr.mxu0 0.0
    %80 = vmatpush1.msra.mxu0 0.0
    %81 = vmatprep.subr.mxu0 0.0
    %82 = vmatpush1.msra.mxu0 0.0
    %83 = vmatprep.subr.mxu0 0.0
    %84 = vmatpush1.msra.mxu0 0.0
    %85 = vmatprep.subr.mxu0 0.0
    %86 = vmatpush1.msra.mxu0 0.0
    %87 = vmatprep.subr.mxu0 0.0
    %88 = vmatpush1.msra.mxu0 0.0
    %89 = vmatprep.subr.mxu0 0.0
    %90 = vmatpush1.msra.mxu0 0.0
    %91 = vmatprep.subr.mxu0 0.0
    %92 = vmatpush1.msra.mxu0 0.0
    %93 = vmatprep.subr.mxu0 0.0
    %94 = vmatpush1.msra.mxu0 0.0
    %95 = vmatprep.subr.mxu0 0.0
    %96 = vmatpush1.msra.mxu0 0.0
    %97 = vmatprep.subr.mxu0 0.0
    %98 = vmatpush1.msra.mxu0 0.0
    %99 = vmatprep.subr.mxu0 0.0
    %100 = vmatpush1.msra.mxu0 0.0
    %101 = vmatprep.subr.mxu0 0.0
    %102 = vmatpush1.msra.mxu0 0.0
    %103 = vmatprep.subr.mxu0 0.0
    %104 = vmatpush1.msra.mxu0 0.0
    %105 = vmatprep.subr.mxu0 0.0
    %106 = vmatpush1.msra.mxu0 0.0
    %107 = vmatprep.subr.mxu0 0.0
    %108 = vmatpush1.msra.mxu0 0.0
    %109 = vmatprep.mubr.f32.mxu0 0.0
    %110 = vmatmul.mubr.f32.gmra.mrb[0].mxu0 %v43
    %v111 = vpop.f32.mrb[0].mxu0
    %v112 = vadd.f32 0.0, %v111
    %v113 = vpop.f32.mrb[0].mxu0
    %v114 = vadd.f32 0.0, %v113
    %115 = vdwg.mxu0
    %v116 = vld [vmem:[#allocation2] sm:$0xff]
    %v117 = vld [vmem:[#allocation2 + $0x8] sm:$0xff]
    %v118 = vld [vmem:[#allocation2 + $0x10] sm:$0xff]
    %v119 = vld [vmem:[#allocation2 + $0x18] sm:$0xff]
    %v120 = vld [vmem:[#allocation2 + $0x20] sm:$0xff]
    %v121 = vld [vmem:[#allocation2 + $0x28] sm:$0xff]
    %v122 = vld [vmem:[#allocation2 + $0x30] sm:$0xff]
    %v123 = vld [vmem:[#allocation2 + $0x38] sm:$0xff]
    %v124 = vld [vmem:[#allocation2 + $0x40] sm:$0xff]
    %v125 = vld [vmem:[#allocation2 + $0x48] sm:$0xff]
    %v126 = vld [vmem:[#allocation2 + $0x50] sm:$0xff]
    %v127 = vld [vmem:[#allocation2 + $0x58] sm:$0xff]
    %v128 = vld [vmem:[#allocation2 + $0x60] sm:$0xff]
    %v129 = vld [vmem:[#allocation2 + $0x68] sm:$0xff]
    %v130 = vld [vmem:[#allocation2 + $0x70] sm:$0xff]
    %v131 = vld [vmem:[#allocation2 + $0x78] sm:$0xff]
    %v132 = vld [vmem:[#allocation2 + $0x80] sm:$0xff]
    %v133 = vld [vmem:[#allocation2 + $0x88] sm:$0xff]
    %v134 = vld [vmem:[#allocation2 + $0x90] sm:$0xff]
    %v135 = vld [vmem:[#allocation2 + $0x98] sm:$0xff]
    %v136 = vld [vmem:[#allocation2 + $0xa0] sm:$0xff]
    %v137 = vld [vmem:[#allocation2 + $0xa8] sm:$0xff]
    %v138 = vld [vmem:[#allocation2 + $0xb0] sm:$0xff]
    %v139 = vld [vmem:[#allocation2 + $0xb8] sm:$0xff]
    %v140 = vld [vmem:[#allocation2 + $0xc0] sm:$0xff]
    %v141 = vld [vmem:[#allocation2 + $0xc8] sm:$0xff]
    %v142 = vld [vmem:[#allocation2 + $0xd0] sm:$0xff]
    %v143 = vld [vmem:[#allocation2 + $0xd8] sm:$0xff]
    %v144 = vld [vmem:[#allocation2 + $0xe0] sm:$0xff]
    %v145 = vld [vmem:[#allocation2 + $0xe8] sm:$0xff]
    %v146 = vld [vmem:[#allocation2 + $0xf0] sm:$0xff]
    %v147 = vld [vmem:[#allocation2 + $0xf8] sm:$0xff]
    %v148 = vld [vmem:[#allocation2 + $0x100] sm:$0xff]
    %v149 = vld [vmem:[#allocation2 + $0x108] sm:$0xff]
    %v150 = vld [vmem:[#allocation2 + $0x110] sm:$0xff]
    %v151 = vld [vmem:[#allocation2 + $0x118] sm:$0xff]
    %v152 = vld [vmem:[#allocation2 + $0x120] sm:$0xff]
    %v153 = vld [vmem:[#allocation2 + $0x128] sm:$0xff]
    %v154 = vld [vmem:[#allocation2 + $0x130] sm:$0xff]
    %v155 = vld [vmem:[#allocation2 + $0x138] sm:$0xff]
    %v156 = vld [vmem:[#allocation2 + $0x140] sm:$0xff]
    %v157 = vld [vmem:[#allocation2 + $0x148] sm:$0xff]
    %v158 = vld [vmem:[#allocation2 + $0x150] sm:$0xff]
    %v159 = vld [vmem:[#allocation2 + $0x158] sm:$0xff]
    %v160 = vld [vmem:[#allocation2 + $0x160] sm:$0xff]
    %v161 = vld [vmem:[#allocation2 + $0x168] sm:$0xff]
    %v162 = vld [vmem:[#allocation2 + $0x170] sm:$0xff]
    %v163 = vld [vmem:[#allocation2 + $0x178] sm:$0xff]
    %v164 = vld [vmem:[#allocation2 + $0x180] sm:$0xff]
    %v165 = vld [vmem:[#allocation2 + $0x188] sm:$0xff]
    %v166 = vld [vmem:[#allocation2 + $0x190] sm:$0xff]
    %v167 = vld [vmem:[#allocation2 + $0x198] sm:$0xff]
    %v168 = vld [vmem:[#allocation2 + $0x1a0] sm:$0xff]
    %v169 = vld [vmem:[#allocation2 + $0x1a8] sm:$0xff]
    %v170 = vld [vmem:[#allocation2 + $0x1b0] sm:$0xff]
    %v171 = vld [vmem:[#allocation2 + $0x1b8] sm:$0xff]
    %v172 = vld [vmem:[#allocation2 + $0x1c0] sm:$0xff]
    %v173 = vld [vmem:[#allocation2 + $0x1c8] sm:$0xff]
    %v174 = vld [vmem:[#allocation2 + $0x1d0] sm:$0xff]
    %v175 = vld [vmem:[#allocation2 + $0x1d8] sm:$0xff]
    %v176 = vld [vmem:[#allocation2 + $0x1e0] sm:$0xff]
    %v177 = vld [vmem:[#allocation2 + $0x1e8] sm:$0xff]
    %v178 = vld [vmem:[#allocation2 + $0x1f0] sm:$0xff]
    %v179 = vld [vmem:[#allocation2 + $0x1f8] sm:$0xff]
    %v180 = vld [vmem:[%s3] sm:$0xff]
    %v181 = vld [vmem:[%s4] sm:$0x3]
    %183 = vset.pattern.permute.xlu0 0
    %184 = vperm.xlu0 %183, %v180
    %v185 = vpop.permute.xlu0 %184
    %v188 = vlaneseq
    %v189 = vshrl.u32 %v188, 7
    %v190 = vsub.s32 0, %v189
    %v191 = vrot.slane %v181, %v190
    %v192 = vlaneseq
    %v193 = vshrl.u32 %v192, 7
    %v194 = vsub.s32 1, %v193
    %v195 = vrot.slane %v181, %v194
    %v198 = vmul.f32 %v185, %v191
    %v199 = vmul.f32 %v185, %v195
    %200 = vmatprep.subr.mxu0 %v117
    %201 = vmatpush1.msra.mxu0 %v116
    %202 = vmatprep.subr.mxu0 %v119
    %203 = vmatpush1.msra.mxu0 %v118
    %204 = vmatprep.subr.mxu0 %v121
    %205 = vmatpush1.msra.mxu0 %v120
    %206 = vmatprep.subr.mxu0 %v123
    %207 = vmatpush1.msra.mxu0 %v122
    %208 = vmatprep.subr.mxu0 %v125
    %209 = vmatpush1.msra.mxu0 %v124
    %210 = vmatprep.subr.mxu0 %v127
    %211 = vmatpush1.msra.mxu0 %v126
    %212 = vmatprep.subr.mxu0 %v129
    %213 = vmatpush1.msra.mxu0 %v128
    %214 = vmatprep.subr.mxu0 %v131
    %215 = vmatpush1.msra.mxu0 %v130
    %216 = vmatprep.subr.mxu0 %v133
    %217 = vmatpush1.msra.mxu0 %v132
    %218 = vmatprep.subr.mxu0 %v135
    %219 = vmatpush1.msra.mxu0 %v134
    %220 = vmatprep.subr.mxu0 %v137
    %221 = vmatpush1.msra.mxu0 %v136
    %222 = vmatprep.subr.mxu0 %v139
    %223 = vmatpush1.msra.mxu0 %v138
    %224 = vmatprep.subr.mxu0 %v141
    %225 = vmatpush1.msra.mxu0 %v140
    %226 = vmatprep.subr.mxu0 %v143
    %227 = vmatpush1.msra.mxu0 %v142
    %228 = vmatprep.subr.mxu0 %v145
    %229 = vmatpush1.msra.mxu0 %v144
    %230 = vmatprep.subr.mxu0 %v147
    %231 = vmatpush1.msra.mxu0 %v146
    %232 = vmatprep.subr.mxu0 %v149
    %233 = vmatpush1.msra.mxu0 %v148
    %234 = vmatprep.subr.mxu0 %v151
    %235 = vmatpush1.msra.mxu0 %v150
    %236 = vmatprep.subr.mxu0 %v153
    %237 = vmatpush1.msra.mxu0 %v152
    %238 = vmatprep.subr.mxu0 %v155
    %239 = vmatpush1.msra.mxu0 %v154
    %240 = vmatprep.subr.mxu0 %v157
    %241 = vmatpush1.msra.mxu0 %v156
    %242 = vmatprep.subr.mxu0 %v159
    %243 = vmatpush1.msra.mxu0 %v158
    %244 = vmatprep.subr.mxu0 %v161
    %245 = vmatpush1.msra.mxu0 %v160
    %246 = vmatprep.subr.mxu0 %v163
    %247 = vmatpush1.msra.mxu0 %v162
    %248 = vmatprep.subr.mxu0 %v165
    %249 = vmatpush1.msra.mxu0 %v164
    %250 = vmatprep.subr.mxu0 %v167
    %251 = vmatpush1.msra.mxu0 %v166
    %252 = vmatprep.subr.mxu0 %v169
    %253 = vmatpush1.msra.mxu0 %v168
    %254 = vmatprep.subr.mxu0 %v171
    %255 = vmatpush1.msra.mxu0 %v170
    %256 = vmatprep.subr.mxu0 %v173
    %257 = vmatpush1.msra.mxu0 %v172
    %258 = vmatprep.subr.mxu0 %v175
    %259 = vmatpush1.msra.mxu0 %v174
    %260 = vmatprep.subr.mxu0 %v177
    %261 = vmatpush1.msra.mxu0 %v176
    %262 = vmatprep.subr.mxu0 %v179
    %263 = vmatpush1.msra.mxu0 %v178
    %264 = vmatprep.mubr.f32.mxu0 %v114
    %265 = vmatmul.mubr.f32.gmra.mrb[0].mxu0 %v112
    %v266 = vpop.f32.mrb[0].mxu0
    %v267 = vadd.f32 %v198, %v266
    %v268 = vpop.f32.mrb[0].mxu0
    %v269 = vadd.f32 %v199, %v268
    %270 = vdwg.mxu0
    %v271 = vld [vmem:[%s5] sm:$0xff]
    %273 = vset.pattern.permute.xlu0 0
    %274 = vperm.xlu0 %273, %v271
    %v275 = vpop.permute.xlu0 %274
    %v277 = vadd.f32 %v267, %v275
    %v278 = vadd.f32 %v269, %v275
    %279 = vst [vmem:[#allocation5] sm:$0xff] %v277
    %280 = vst [vmem:[#allocation5 + $0x8] sm:$0xff] %v278
    // Predicated region
    $region30: #{tpu_custom_call.1} parent=1 // pred_check
      _
    $region31: #{tpu_custom_call.1} parent=1 // pred_check_branch
      %282 = sbr.rel (0) target = $region33
    $region32: #{tpu_custom_call.1} parent=1 // pred_region
      %s284 = ssub.s32 256, 256
      %285 = vsyncadd [#allocation4], %s284
      %s287 = sshll.u32 [#allocation5], 4
      %s288 = int_to_ptr.vmem [resolvable:$true] %s287
      %290 = dma.vmem_to_hbm [thread:$0]  %s288, 256, %s6, [#allocation4]
    $region33: #{tpu_custom_call.1} parent=1 // pred_fallthru
      _
    // Predicated region
    $region34: #{tpu_custom_call.1} parent=1 // pred_check
      _
    $region35: #{tpu_custom_call.1} parent=1 // pred_check_branch
      %292 = sbr.rel (0) target = $region37
    $region36: #{tpu_custom_call.1} parent=1 // pred_region
      %293 = dma.done [#allocation4], 256
    $region37: #{tpu_custom_call.1} parent=1 // pred_fallthru
      _
    %294 = vsyncpa [#allocation3], 1
    %295 = vsyncpa [#allocation4], 1

</llo_original>
